<compile_context>
chip_gen: v6e
topology: v6e:2x2x1
jax: 0.10.0
libtpu: 0.0.40
codegen_flags: <defaults>
</compile_context>

<pallas_src>
import functools

import jax
import jax.numpy as jnp
from jax import lax
from jax.experimental import pallas as pl
from jax.experimental.pallas import tpu as pltpu


def _round_up(x: int, m: int) -> int:
    return (x + m - 1) // m * m


def _make_fuse_kernel(s_pad: int):
    """Build the kernel body closed over the padded sequence length."""

    def _fuse_kernel(tokens_ref, emb_hbm, pos_ref, out_ref, gather_buf, sems):
        # tokens_ref: SMEM (B * s_pad,) int32   (scalar prefetch)
        # emb_hbm:    HBM  (V, H) f32           (memory_space=pl.ANY, manual DMA)
        # pos_ref:    VMEM (1, TILE_S, H) f32   (tiled over S, reused over batch)
        # out_ref:    VMEM (1, TILE_S, H) f32
        # gather_buf: VMEM (TILE_S, H) f32      scratch
        # sems:       DMA semaphores (TILE_S,)  scratch
        si = pl.program_id(0)
        b = pl.program_id(1)
        tile_s = out_ref.shape[1]
        base = b * s_pad + si * tile_s

        # 1) Issue all TILE_S row gathers before waiting on any of them so the
        #    per-row HBM latency is overlapped across many in-flight DMAs.
        def issue(s, carry):
            tok = tokens_ref[base + s]
            pltpu.make_async_copy(
                emb_hbm.at[pl.ds(tok, 1)],
                gather_buf.at[pl.ds(s, 1)],
                sems.at[s],
            ).start()
            return carry

        lax.fori_loop(0, tile_s, issue, 0, unroll=True)

        # 2) Wait for all of them (descriptor shape only matters for the wait).
        def wait(s, carry):
            pltpu.make_async_copy(
                emb_hbm.at[pl.ds(0, 1)],
                gather_buf.at[pl.ds(s, 1)],
                sems.at[s],
            ).wait()
            return carry

        lax.fori_loop(0, tile_s, wait, 0, unroll=True)

        # 3) One vectorized add + one dense, lane-dense (TILE_S, H) store.
        out_ref[0, :, :] = gather_buf[...] + pos_ref[0, :, :]

    return _fuse_kernel


@functools.partial(jax.jit, static_argnames=("tile_s",))
def _fuse_call(tokens_flat, token_embedding, pos_padded, *, tile_s):
    bsp, = tokens_flat.shape
    _, s_pad, h = pos_padded.shape
    batch = bsp // s_pad

    grid_spec = pltpu.PrefetchScalarGridSpec(
        num_scalar_prefetch=1,  # tokens -> SMEM, passed to index_maps positionally
        grid=(s_pad // tile_s, batch),  # seq tiles outer, batch inner (pos reuse)
        in_specs=[
            pl.BlockSpec(memory_space=pl.ANY),  # embedding table stays in HBM
            # Constant across the inner (batch) grid axis -> Pallas skips the
            # redundant re-fetch of the positional tile between batch steps.
            pl.BlockSpec((1, tile_s, h), lambda si, b, tok: (0, si, 0)),
        ],
        out_specs=pl.BlockSpec((1, tile_s, h), lambda si, b, tok: (b, si, 0)),
        scratch_shapes=[
            pltpu.VMEM((tile_s, h), jnp.float32),
            pltpu.SemaphoreType.DMA((tile_s,)),
        ],
    )

    return pl.pallas_call(
        _make_fuse_kernel(s_pad),
        out_shape=jax.ShapeDtypeStruct((batch, s_pad, h), jnp.float32),
        grid_spec=grid_spec,
        compiler_params=pltpu.CompilerParams(
            dimension_semantics=("parallel", "parallel"),
        ),
    )(tokens_flat, token_embedding, pos_padded)


def pretrain_fuse_forward(tokens, token_embedding, pos_embedding, valid_lens=None,
                          *, tile_s=128):
    """JAX/Pallas equivalent of PretrainFuseModel.forward.

    tokens:          (B, S) int32
    token_embedding: (V, H) float32
    pos_embedding:   (1, MAX_LEN, H) float32
    valid_lens:      (B,) int32 — only used for length semantics in PyTorch;
                     the broadcast add there requires int(valid_lens.max())+1 == S,
                     so we slice to S statically and avoid a host sync.
    """
    del valid_lens  # see note above: broadcast semantics force length == S
    B, S = tokens.shape
    V, H = token_embedding.shape

    pos_slice = pos_embedding[:, :S, :]

    # Tile the sequence axis; TILE_S is a multiple of 8 (sublane-dense stores).
    tile_s = _round_up(max(8, min(int(tile_s), _round_up(S, 8))), 8)
    s_pad = _round_up(S, tile_s)

    tokens = jnp.clip(tokens.astype(jnp.int32), 0, V - 1)  # guard OOB gathers
    if s_pad != S:
        tokens = jnp.pad(tokens, ((0, 0), (0, s_pad - S)))           # pad with token 0
        pos_slice = jnp.pad(pos_slice, ((0, 0), (0, s_pad - S), (0, 0)))
    tokens_flat = tokens.reshape(B * s_pad)  # 1-D SMEM layout (no 2-D lane padding)

    out = _fuse_call(tokens_flat, token_embedding.astype(jnp.float32),
                     pos_slice.astype(jnp.float32), tile_s=tile_s)
    return out[:, :S, :]


if __name__ == "__main__":
    # Small, deterministic synthetic shapes consistent with the forward pass.
    B, S, H = 2, 8, 128         # batch, seq, hidden (H lane-dense)
    V, MAX_LEN = 64, 16         # vocab size, max positional length

    key = jax.random.PRNGKey(0)
    k_emb, k_pos, k_tok = jax.random.split(key, 3)

    token_embedding = jax.random.normal(k_emb, (V, H), dtype=jnp.float32)
    pos_embedding = jax.random.normal(k_pos, (1, MAX_LEN, H), dtype=jnp.float32)
    tokens = jax.random.randint(k_tok, (B, S), 0, V, dtype=jnp.int32)
    valid_lens = jnp.array([S - 1, S - 3], dtype=jnp.int32)  # max()+1 == S

    out = pretrain_fuse_forward(tokens, token_embedding, pos_embedding, valid_lens)
    out = jax.block_until_ready(out)

    # Pure-JAX reference (identical to the PyTorch forward).
    ref = token_embedding[tokens] + pos_embedding[:, :S, :]

    assert out.shape == (B, S, H), out.shape
    assert jnp.allclose(out, ref, atol=1e-6, rtol=1e-6), "mismatch vs reference"

    print("KERNEL_OK")
</pallas_src>

<mosaic_0001>
module attributes {stable_mosaic.version = 11 : i64} {
  func.func @_fuse_kernel(%arg0: i32, %arg1: i32, %arg2: memref<16xi32, #tpu.memory_space<smem>>, %arg3: memref<64x128xf32, #tpu.memory_space<any>>, %arg4: memref<1x8x128xf32, #tpu.memory_space<vmem>>, %arg5: memref<1x8x128xf32, #tpu.memory_space<vmem>>, %arg6: memref<8x128xf32, #tpu.memory_space<vmem>>, %arg7: memref<8x!tpu.dma_semaphore, #tpu.memory_space<semaphore_mem>>) attributes {dimension_semantics = [#tpu.dimension_semantics<parallel>, #tpu.dimension_semantics<parallel>], iteration_bounds = array<i64: 1, 2>, scalar_prefetch = 1 : i64, scratch_operands = 2 : i64, tpu.core_type = #tpu.core_type<tc>, window_params = [{}, {transform_indices = @transform_1, window_bounds = array<i64: 1, 8, 128>}, {transform_indices = @transform_2, window_bounds = array<i64: 1, 8, 128>}]} {
    %c8_i32 = arith.constant 8 : i32
    %0 = arith.muli %arg1, %c8_i32 : i32
    %c8_i32_0 = arith.constant 8 : i32
    %1 = arith.muli %arg0, %c8_i32_0 : i32
    %2 = arith.addi %0, %1 : i32
    %c0_i32 = arith.constant 0 : i32
    %3 = arith.addi %2, %c0_i32 : i32
    %4 = arith.index_cast %3 : i32 to index
    %5 = memref.load %arg2[%4] : memref<16xi32, #tpu.memory_space<smem>>
    %c0_i32_1 = arith.constant 0 : i32
    %6 = tpu.memref_slice %arg3[%5, %c0_i32_1] : memref<64x128xf32, #tpu.memory_space<any>> -> memref<1x128xf32, #tpu.memory_space<any>>
    %c0_i32_2 = arith.constant 0 : i32
    %7 = tpu.memref_slice %arg6[%c0_i32, %c0_i32_2] : memref<8x128xf32, #tpu.memory_space<vmem>> -> memref<1x128xf32, #tpu.memory_space<vmem>>
    %8 = tpu.memref_slice %arg7[%c0_i32] : memref<8x!tpu.dma_semaphore, #tpu.memory_space<semaphore_mem>> -> memref<1x!tpu.dma_semaphore, #tpu.memory_space<semaphore_mem>>
    %9 = tpu.memref_squeeze %8 : memref<1x!tpu.dma_semaphore, #tpu.memory_space<semaphore_mem>> -> memref<!tpu.dma_semaphore, #tpu.memory_space<semaphore_mem>>
    tpu.enqueue_dma source(%6 : memref<1x128xf32, #tpu.memory_space<any>>) target(%7 : memref<1x128xf32, #tpu.memory_space<vmem>>) target_semaphore(%9 : memref<!tpu.dma_semaphore, #tpu.memory_space<semaphore_mem>>)
    %c1_i32 = arith.constant 1 : i32
    %10 = arith.addi %2, %c1_i32 : i32
    %11 = arith.index_cast %10 : i32 to index
    %12 = memref.load %arg2[%11] : memref<16xi32, #tpu.memory_space<smem>>
    %c0_i32_3 = arith.constant 0 : i32
    %13 = tpu.memref_slice %arg3[%12, %c0_i32_3] : memref<64x128xf32, #tpu.memory_space<any>> -> memref<1x128xf32, #tpu.memory_space<any>>
    %c0_i32_4 = arith.constant 0 : i32
    %14 = tpu.memref_slice %arg6[%c1_i32, %c0_i32_4] : memref<8x128xf32, #tpu.memory_space<vmem>> -> memref<1x128xf32, #tpu.memory_space<vmem>>
    %15 = tpu.memref_slice %arg7[%c1_i32] : memref<8x!tpu.dma_semaphore, #tpu.memory_space<semaphore_mem>> -> memref<1x!tpu.dma_semaphore, #tpu.memory_space<semaphore_mem>>
    %16 = tpu.memref_squeeze %15 : memref<1x!tpu.dma_semaphore, #tpu.memory_space<semaphore_mem>> -> memref<!tpu.dma_semaphore, #tpu.memory_space<semaphore_mem>>
    tpu.enqueue_dma source(%13 : memref<1x128xf32, #tpu.memory_space<any>>) target(%14 : memref<1x128xf32, #tpu.memory_space<vmem>>) target_semaphore(%16 : memref<!tpu.dma_semaphore, #tpu.memory_space<semaphore_mem>>)
    %c2_i32 = arith.constant 2 : i32
    %17 = arith.addi %2, %c2_i32 : i32
    %18 = arith.index_cast %17 : i32 to index
    %19 = memref.load %arg2[%18] : memref<16xi32, #tpu.memory_space<smem>>
    %c0_i32_5 = arith.constant 0 : i32
    %20 = tpu.memref_slice %arg3[%19, %c0_i32_5] : memref<64x128xf32, #tpu.memory_space<any>> -> memref<1x128xf32, #tpu.memory_space<any>>
    %c0_i32_6 = arith.constant 0 : i32
    %21 = tpu.memref_slice %arg6[%c2_i32, %c0_i32_6] : memref<8x128xf32, #tpu.memory_space<vmem>> -> memref<1x128xf32, #tpu.memory_space<vmem>>
    %22 = tpu.memref_slice %arg7[%c2_i32] : memref<8x!tpu.dma_semaphore, #tpu.memory_space<semaphore_mem>> -> memref<1x!tpu.dma_semaphore, #tpu.memory_space<semaphore_mem>>
    %23 = tpu.memref_squeeze %22 : memref<1x!tpu.dma_semaphore, #tpu.memory_space<semaphore_mem>> -> memref<!tpu.dma_semaphore, #tpu.memory_space<semaphore_mem>>
    tpu.enqueue_dma source(%20 : memref<1x128xf32, #tpu.memory_space<any>>) target(%21 : memref<1x128xf32, #tpu.memory_space<vmem>>) target_semaphore(%23 : memref<!tpu.dma_semaphore, #tpu.memory_space<semaphore_mem>>)
    %c3_i32 = arith.constant 3 : i32
    %24 = arith.addi %2, %c3_i32 : i32
    %25 = arith.index_cast %24 : i32 to index
    %26 = memref.load %arg2[%25] : memref<16xi32, #tpu.memory_space<smem>>
    %c0_i32_7 = arith.constant 0 : i32
    %27 = tpu.memref_slice %arg3[%26, %c0_i32_7] : memref<64x128xf32, #tpu.memory_space<any>> -> memref<1x128xf32, #tpu.memory_space<any>>
    %c0_i32_8 = arith.constant 0 : i32
    %28 = tpu.memref_slice %arg6[%c3_i32, %c0_i32_8] : memref<8x128xf32, #tpu.memory_space<vmem>> -> memref<1x128xf32, #tpu.memory_space<vmem>>
    %29 = tpu.memref_slice %arg7[%c3_i32] : memref<8x!tpu.dma_semaphore, #tpu.memory_space<semaphore_mem>> -> memref<1x!tpu.dma_semaphore, #tpu.memory_space<semaphore_mem>>
    %30 = tpu.memref_squeeze %29 : memref<1x!tpu.dma_semaphore, #tpu.memory_space<semaphore_mem>> -> memref<!tpu.dma_semaphore, #tpu.memory_space<semaphore_mem>>
    tpu.enqueue_dma source(%27 : memref<1x128xf32, #tpu.memory_space<any>>) target(%28 : memref<1x128xf32, #tpu.memory_space<vmem>>) target_semaphore(%30 : memref<!tpu.dma_semaphore, #tpu.memory_space<semaphore_mem>>)
    %c4_i32 = arith.constant 4 : i32
    %31 = arith.addi %2, %c4_i32 : i32
    %32 = arith.index_cast %31 : i32 to index
    %33 = memref.load %arg2[%32] : memref<16xi32, #tpu.memory_space<smem>>
    %c0_i32_9 = arith.constant 0 : i32
    %34 = tpu.memref_slice %arg3[%33, %c0_i32_9] : memref<64x128xf32, #tpu.memory_space<any>> -> memref<1x128xf32, #tpu.memory_space<any>>
    %c0_i32_10 = arith.constant 0 : i32
    %35 = tpu.memref_slice %arg6[%c4_i32, %c0_i32_10] : memref<8x128xf32, #tpu.memory_space<vmem>> -> memref<1x128xf32, #tpu.memory_space<vmem>>
    %36 = tpu.memref_slice %arg7[%c4_i32] : memref<8x!tpu.dma_semaphore, #tpu.memory_space<semaphore_mem>> -> memref<1x!tpu.dma_semaphore, #tpu.memory_space<semaphore_mem>>
    %37 = tpu.memref_squeeze %36 : memref<1x!tpu.dma_semaphore, #tpu.memory_space<semaphore_mem>> -> memref<!tpu.dma_semaphore, #tpu.memory_space<semaphore_mem>>
    tpu.enqueue_dma source(%34 : memref<1x128xf32, #tpu.memory_space<any>>) target(%35 : memref<1x128xf32, #tpu.memory_space<vmem>>) target_semaphore(%37 : memref<!tpu.dma_semaphore, #tpu.memory_space<semaphore_mem>>)
    %c5_i32 = arith.constant 5 : i32
    %38 = arith.addi %2, %c5_i32 : i32
    %39 = arith.index_cast %38 : i32 to index
    %40 = memref.load %arg2[%39] : memref<16xi32, #tpu.memory_space<smem>>
    %c0_i32_11 = arith.constant 0 : i32
    %41 = tpu.memref_slice %arg3[%40, %c0_i32_11] : memref<64x128xf32, #tpu.memory_space<any>> -> memref<1x128xf32, #tpu.memory_space<any>>
    %c0_i32_12 = arith.constant 0 : i32
    %42 = tpu.memref_slice %arg6[%c5_i32, %c0_i32_12] : memref<8x128xf32, #tpu.memory_space<vmem>> -> memref<1x128xf32, #tpu.memory_space<vmem>>
    %43 = tpu.memref_slice %arg7[%c5_i32] : memref<8x!tpu.dma_semaphore, #tpu.memory_space<semaphore_mem>> -> memref<1x!tpu.dma_semaphore, #tpu.memory_space<semaphore_mem>>
    %44 = tpu.memref_squeeze %43 : memref<1x!tpu.dma_semaphore, #tpu.memory_space<semaphore_mem>> -> memref<!tpu.dma_semaphore, #tpu.memory_space<semaphore_mem>>
    tpu.enqueue_dma source(%41 : memref<1x128xf32, #tpu.memory_space<any>>) target(%42 : memref<1x128xf32, #tpu.memory_space<vmem>>) target_semaphore(%44 : memref<!tpu.dma_semaphore, #tpu.memory_space<semaphore_mem>>)
    %c6_i32 = arith.constant 6 : i32
    %45 = arith.addi %2, %c6_i32 : i32
    %46 = arith.index_cast %45 : i32 to index
    %47 = memref.load %arg2[%46] : memref<16xi32, #tpu.memory_space<smem>>
    %c0_i32_13 = arith.constant 0 : i32
    %48 = tpu.memref_slice %arg3[%47, %c0_i32_13] : memref<64x128xf32, #tpu.memory_space<any>> -> memref<1x128xf32, #tpu.memory_space<any>>
    %c0_i32_14 = arith.constant 0 : i32
    %49 = tpu.memref_slice %arg6[%c6_i32, %c0_i32_14] : memref<8x128xf32, #tpu.memory_space<vmem>> -> memref<1x128xf32, #tpu.memory_space<vmem>>
    %50 = tpu.memref_slice %arg7[%c6_i32] : memref<8x!tpu.dma_semaphore, #tpu.memory_space<semaphore_mem>> -> memref<1x!tpu.dma_semaphore, #tpu.memory_space<semaphore_mem>>
    %51 = tpu.memref_squeeze %50 : memref<1x!tpu.dma_semaphore, #tpu.memory_space<semaphore_mem>> -> memref<!tpu.dma_semaphore, #tpu.memory_space<semaphore_mem>>
    tpu.enqueue_dma source(%48 : memref<1x128xf32, #tpu.memory_space<any>>) target(%49 : memref<1x128xf32, #tpu.memory_space<vmem>>) target_semaphore(%51 : memref<!tpu.dma_semaphore, #tpu.memory_space<semaphore_mem>>)
    %c7_i32 = arith.constant 7 : i32
    %52 = arith.addi %2, %c7_i32 : i32
    %53 = arith.index_cast %52 : i32 to index
    %54 = memref.load %arg2[%53] : memref<16xi32, #tpu.memory_space<smem>>
    %c0_i32_15 = arith.constant 0 : i32
    %55 = tpu.memref_slice %arg3[%54, %c0_i32_15] : memref<64x128xf32, #tpu.memory_space<any>> -> memref<1x128xf32, #tpu.memory_space<any>>
    %c0_i32_16 = arith.constant 0 : i32
    %56 = tpu.memref_slice %arg6[%c7_i32, %c0_i32_16] : memref<8x128xf32, #tpu.memory_space<vmem>> -> memref<1x128xf32, #tpu.memory_space<vmem>>
    %57 = tpu.memref_slice %arg7[%c7_i32] : memref<8x!tpu.dma_semaphore, #tpu.memory_space<semaphore_mem>> -> memref<1x!tpu.dma_semaphore, #tpu.memory_space<semaphore_mem>>
    %58 = tpu.memref_squeeze %57 : memref<1x!tpu.dma_semaphore, #tpu.memory_space<semaphore_mem>> -> memref<!tpu.dma_semaphore, #tpu.memory_space<semaphore_mem>>
    tpu.enqueue_dma source(%55 : memref<1x128xf32, #tpu.memory_space<any>>) target(%56 : memref<1x128xf32, #tpu.memory_space<vmem>>) target_semaphore(%58 : memref<!tpu.dma_semaphore, #tpu.memory_space<semaphore_mem>>)
    %c8_i32_17 = arith.constant 8 : i32
    %c0_i32_18 = arith.constant 0 : i32
    %c0_i32_19 = arith.constant 0 : i32
    %c0_i32_20 = arith.constant 0 : i32
    %59 = tpu.memref_slice %arg3[%c0_i32_19, %c0_i32_20] : memref<64x128xf32, #tpu.memory_space<any>> -> memref<1x128xf32, #tpu.memory_space<any>>
    %c0_i32_21 = arith.constant 0 : i32
    %60 = tpu.memref_slice %arg6[%c0_i32_18, %c0_i32_21] : memref<8x128xf32, #tpu.memory_space<vmem>> -> memref<1x128xf32, #tpu.memory_space<vmem>>
    %61 = tpu.memref_slice %arg7[%c0_i32_18] : memref<8x!tpu.dma_semaphore, #tpu.memory_space<semaphore_mem>> -> memref<1x!tpu.dma_semaphore, #tpu.memory_space<semaphore_mem>>
    %62 = tpu.memref_squeeze %61 : memref<1x!tpu.dma_semaphore, #tpu.memory_space<semaphore_mem>> -> memref<!tpu.dma_semaphore, #tpu.memory_space<semaphore_mem>>
    tpu.wait_dma2 semaphore(%62 : memref<!tpu.dma_semaphore, #tpu.memory_space<semaphore_mem>>) src(%59 : memref<1x128xf32, #tpu.memory_space<any>>) dst(%60 : memref<1x128xf32, #tpu.memory_space<vmem>>)
    %c1_i32_22 = arith.constant 1 : i32
    %c0_i32_23 = arith.constant 0 : i32
    %c0_i32_24 = arith.constant 0 : i32
    %63 = tpu.memref_slice %arg3[%c0_i32_23, %c0_i32_24] : memref<64x128xf32, #tpu.memory_space<any>> -> memref<1x128xf32, #tpu.memory_space<any>>
    %c0_i32_25 = arith.constant 0 : i32
    %64 = tpu.memref_slice %arg6[%c1_i32_22, %c0_i32_25] : memref<8x128xf32, #tpu.memory_space<vmem>> -> memref<1x128xf32, #tpu.memory_space<vmem>>
    %65 = tpu.memref_slice %arg7[%c1_i32_22] : memref<8x!tpu.dma_semaphore, #tpu.memory_space<semaphore_mem>> -> memref<1x!tpu.dma_semaphore, #tpu.memory_space<semaphore_mem>>
    %66 = tpu.memref_squeeze %65 : memref<1x!tpu.dma_semaphore, #tpu.memory_space<semaphore_mem>> -> memref<!tpu.dma_semaphore, #tpu.memory_space<semaphore_mem>>
    tpu.wait_dma2 semaphore(%66 : memref<!tpu.dma_semaphore, #tpu.memory_space<semaphore_mem>>) src(%63 : memref<1x128xf32, #tpu.memory_space<any>>) dst(%64 : memref<1x128xf32, #tpu.memory_space<vmem>>)
    %c2_i32_26 = arith.constant 2 : i32
    %c0_i32_27 = arith.constant 0 : i32
    %c0_i32_28 = arith.constant 0 : i32
    %67 = tpu.memref_slice %arg3[%c0_i32_27, %c0_i32_28] : memref<64x128xf32, #tpu.memory_space<any>> -> memref<1x128xf32, #tpu.memory_space<any>>
    %c0_i32_29 = arith.constant 0 : i32
    %68 = tpu.memref_slice %arg6[%c2_i32_26, %c0_i32_29] : memref<8x128xf32, #tpu.memory_space<vmem>> -> memref<1x128xf32, #tpu.memory_space<vmem>>
    %69 = tpu.memref_slice %arg7[%c2_i32_26] : memref<8x!tpu.dma_semaphore, #tpu.memory_space<semaphore_mem>> -> memref<1x!tpu.dma_semaphore, #tpu.memory_space<semaphore_mem>>
    %70 = tpu.memref_squeeze %69 : memref<1x!tpu.dma_semaphore, #tpu.memory_space<semaphore_mem>> -> memref<!tpu.dma_semaphore, #tpu.memory_space<semaphore_mem>>
    tpu.wait_dma2 semaphore(%70 : memref<!tpu.dma_semaphore, #tpu.memory_space<semaphore_mem>>) src(%67 : memref<1x128xf32, #tpu.memory_space<any>>) dst(%68 : memref<1x128xf32, #tpu.memory_space<vmem>>)
    %c3_i32_30 = arith.constant 3 : i32
    %c0_i32_31 = arith.constant 0 : i32
    %c0_i32_32 = arith.constant 0 : i32
    %71 = tpu.memref_slice %arg3[%c0_i32_31, %c0_i32_32] : memref<64x128xf32, #tpu.memory_space<any>> -> memref<1x128xf32, #tpu.memory_space<any>>
    %c0_i32_33 = arith.constant 0 : i32
    %72 = tpu.memref_slice %arg6[%c3_i32_30, %c0_i32_33] : memref<8x128xf32, #tpu.memory_space<vmem>> -> memref<1x128xf32, #tpu.memory_space<vmem>>
    %73 = tpu.memref_slice %arg7[%c3_i32_30] : memref<8x!tpu.dma_semaphore, #tpu.memory_space<semaphore_mem>> -> memref<1x!tpu.dma_semaphore, #tpu.memory_space<semaphore_mem>>
    %74 = tpu.memref_squeeze %73 : memref<1x!tpu.dma_semaphore, #tpu.memory_space<semaphore_mem>> -> memref<!tpu.dma_semaphore, #tpu.memory_space<semaphore_mem>>
    tpu.wait_dma2 semaphore(%74 : memref<!tpu.dma_semaphore, #tpu.memory_space<semaphore_mem>>) src(%71 : memref<1x128xf32, #tpu.memory_space<any>>) dst(%72 : memref<1x128xf32, #tpu.memory_space<vmem>>)
    %c4_i32_34 = arith.constant 4 : i32
    %c0_i32_35 = arith.constant 0 : i32
    %c0_i32_36 = arith.constant 0 : i32
    %75 = tpu.memref_slice %arg3[%c0_i32_35, %c0_i32_36] : memref<64x128xf32, #tpu.memory_space<any>> -> memref<1x128xf32, #tpu.memory_space<any>>
    %c0_i32_37 = arith.constant 0 : i32
    %76 = tpu.memref_slice %arg6[%c4_i32_34, %c0_i32_37] : memref<8x128xf32, #tpu.memory_space<vmem>> -> memref<1x128xf32, #tpu.memory_space<vmem>>
    %77 = tpu.memref_slice %arg7[%c4_i32_34] : memref<8x!tpu.dma_semaphore, #tpu.memory_space<semaphore_mem>> -> memref<1x!tpu.dma_semaphore, #tpu.memory_space<semaphore_mem>>
    %78 = tpu.memref_squeeze %77 : memref<1x!tpu.dma_semaphore, #tpu.memory_space<semaphore_mem>> -> memref<!tpu.dma_semaphore, #tpu.memory_space<semaphore_mem>>
    tpu.wait_dma2 semaphore(%78 : memref<!tpu.dma_semaphore, #tpu.memory_space<semaphore_mem>>) src(%75 : memref<1x128xf32, #tpu.memory_space<any>>) dst(%76 : memref<1x128xf32, #tpu.memory_space<vmem>>)
    %c5_i32_38 = arith.constant 5 : i32
    %c0_i32_39 = arith.constant 0 : i32
    %c0_i32_40 = arith.constant 0 : i32
    %79 = tpu.memref_slice %arg3[%c0_i32_39, %c0_i32_40] : memref<64x128xf32, #tpu.memory_space<any>> -> memref<1x128xf32, #tpu.memory_space<any>>
    %c0_i32_41 = arith.constant 0 : i32
    %80 = tpu.memref_slice %arg6[%c5_i32_38, %c0_i32_41] : memref<8x128xf32, #tpu.memory_space<vmem>> -> memref<1x128xf32, #tpu.memory_space<vmem>>
    %81 = tpu.memref_slice %arg7[%c5_i32_38] : memref<8x!tpu.dma_semaphore, #tpu.memory_space<semaphore_mem>> -> memref<1x!tpu.dma_semaphore, #tpu.memory_space<semaphore_mem>>
    %82 = tpu.memref_squeeze %81 : memref<1x!tpu.dma_semaphore, #tpu.memory_space<semaphore_mem>> -> memref<!tpu.dma_semaphore, #tpu.memory_space<semaphore_mem>>
    tpu.wait_dma2 semaphore(%82 : memref<!tpu.dma_semaphore, #tpu.memory_space<semaphore_mem>>) src(%79 : memref<1x128xf32, #tpu.memory_space<any>>) dst(%80 : memref<1x128xf32, #tpu.memory_space<vmem>>)
    %c6_i32_42 = arith.constant 6 : i32
    %c0_i32_43 = arith.constant 0 : i32
    %c0_i32_44 = arith.constant 0 : i32
    %83 = tpu.memref_slice %arg3[%c0_i32_43, %c0_i32_44] : memref<64x128xf32, #tpu.memory_space<any>> -> memref<1x128xf32, #tpu.memory_space<any>>
    %c0_i32_45 = arith.constant 0 : i32
    %84 = tpu.memref_slice %arg6[%c6_i32_42, %c0_i32_45] : memref<8x128xf32, #tpu.memory_space<vmem>> -> memref<1x128xf32, #tpu.memory_space<vmem>>
    %85 = tpu.memref_slice %arg7[%c6_i32_42] : memref<8x!tpu.dma_semaphore, #tpu.memory_space<semaphore_mem>> -> memref<1x!tpu.dma_semaphore, #tpu.memory_space<semaphore_mem>>
    %86 = tpu.memref_squeeze %85 : memref<1x!tpu.dma_semaphore, #tpu.memory_space<semaphore_mem>> -> memref<!tpu.dma_semaphore, #tpu.memory_space<semaphore_mem>>
    tpu.wait_dma2 semaphore(%86 : memref<!tpu.dma_semaphore, #tpu.memory_space<semaphore_mem>>) src(%83 : memref<1x128xf32, #tpu.memory_space<any>>) dst(%84 : memref<1x128xf32, #tpu.memory_space<vmem>>)
    %c7_i32_46 = arith.constant 7 : i32
    %c0_i32_47 = arith.constant 0 : i32
    %c0_i32_48 = arith.constant 0 : i32
    %87 = tpu.memref_slice %arg3[%c0_i32_47, %c0_i32_48] : memref<64x128xf32, #tpu.memory_space<any>> -> memref<1x128xf32, #tpu.memory_space<any>>
    %c0_i32_49 = arith.constant 0 : i32
    %88 = tpu.memref_slice %arg6[%c7_i32_46, %c0_i32_49] : memref<8x128xf32, #tpu.memory_space<vmem>> -> memref<1x128xf32, #tpu.memory_space<vmem>>
    %89 = tpu.memref_slice %arg7[%c7_i32_46] : memref<8x!tpu.dma_semaphore, #tpu.memory_space<semaphore_mem>> -> memref<1x!tpu.dma_semaphore, #tpu.memory_space<semaphore_mem>>
    %90 = tpu.memref_squeeze %89 : memref<1x!tpu.dma_semaphore, #tpu.memory_space<semaphore_mem>> -> memref<!tpu.dma_semaphore, #tpu.memory_space<semaphore_mem>>
    tpu.wait_dma2 semaphore(%90 : memref<!tpu.dma_semaphore, #tpu.memory_space<semaphore_mem>>) src(%87 : memref<1x128xf32, #tpu.memory_space<any>>) dst(%88 : memref<1x128xf32, #tpu.memory_space<vmem>>)
    %c8_i32_50 = arith.constant 8 : i32
    %c0 = arith.constant 0 : index
    %c0_51 = arith.constant 0 : index
    %91 = vector.load %arg6[%c0, %c0_51] : memref<8x128xf32, #tpu.memory_space<vmem>>, vector<8x128xf32>
    %c0_52 = arith.constant 0 : index
    %c0_53 = arith.constant 0 : index
    %c0_54 = arith.constant 0 : index
    %92 = vector.load %arg4[%c0_52, %c0_53, %c0_54] : memref<1x8x128xf32, #tpu.memory_space<vmem>>, vector<1x8x128xf32>
    %93 = vector.shape_cast %92 : vector<1x8x128xf32> to vector<8x128xf32>
    %94 = arith.addf %91, %93 : vector<8x128xf32>
    %c0_55 = arith.constant 0 : index
    %c0_56 = arith.constant 0 : index
    %c0_57 = arith.constant 0 : index
    %95 = vector.load %arg5[%c0_55, %c0_56, %c0_57] : memref<1x8x128xf32, #tpu.memory_space<vmem>>, vector<1x8x128xf32>
    %96 = vector.shape_cast %95 : vector<1x8x128xf32> to vector<8x128xf32>
    %97 = vector.shape_cast %94 : vector<8x128xf32> to vector<1x8x128xf32>
    tpu.vector_store %arg5[%c0_55, %c0_56, %c0_57], %97 {strides = array<i32>} : memref<1x8x128xf32, #tpu.memory_space<vmem>>, vector<1x8x128xf32>,
    return
  }
  func.func @transform_1(%arg0: i32, %arg1: i32, %arg2: memref<16xi32, #tpu.memory_space<smem>>) -> (i32, i32, i32) {
    %c0_i32 = arith.constant 0 : i32
    %c0_i32_0 = arith.constant 0 : i32
    %c0_i32_1 = arith.constant 0 : i32
    return %c0_i32, %arg0, %c0_i32_0 : i32, i32, i32
  }
  func.func @transform_2(%arg0: i32, %arg1: i32, %arg2: memref<16xi32, #tpu.memory_space<smem>>) -> (i32, i32, i32) {
    %c0_i32 = arith.constant 0 : i32
    %c0_i32_0 = arith.constant 0 : i32
    return %arg1, %arg0, %c0_i32 : i32, i32, i32
  }
}

</mosaic_0001>

<llo_original>
// kernel: _fuse_call.1
$region0: #{_fuse_call.1}
  #allocation0 [shape = 'u32[]', space=smem, size = 0x4, offset = 0x4, fixed_abs, tag = 'smem constant byte address 0x4 - core index']
  #allocation1 [shape = 'u32[144,128]{1,0:T(1,128)}', space=vmem, size = 0x12000, scoped, tag = 'internal scratch']
  #allocation2 [shape = 'f32[8,128]{1,0:T(8,128)}', space=vmem, size = 0x1000, scoped, tag = 'scratch operand']
  #allocation3 [shape = 's32[8]{0}', space=sflag, size = 0x20, scoped, tag = 'scratch operand']
  #allocation4 [shape = 's32[1]{0}', space=sflag, size = 0x4, scoped, tag = 'scoped memory for _fuse_call.1']
  #allocation5 [shape = 'u8[512]{0}', space=smem, size = 0x200, scoped, tag = 'prefetched SMEM operand 0']
  #allocation10 [shape = 's32[]', space=sflag, size = 0x4, offset = 0, fixed_abs, tag = 'sflag constant byte address 0x0 - dummy sync flag']
  #allocation11 [shape = 's32[]', space=sflag, size = 0x4, offset = 0, fixed_abs, tag = 'sflag constant byte address 0x0 - dummy sync flag']
  #allocation12 [shape = 'u32[]', space=smem, size = 0x4, offset = 0x44, fixed_abs, tag = 'smem constant byte address 0x44 - assertion arg 0']
  #allocation13 [shape = 'u32[]', space=smem, size = 0x4, offset = 0x48, fixed_abs, tag = 'smem constant byte address 0x48 - assertion arg 1']
  #allocation14 [shape = 's32[]', space=sflag, size = 0x4, offset = 0, fixed_abs, tag = 'sflag constant byte address 0x0 - dummy sync flag']
  #allocation15 [shape = 's32[]', space=sflag, size = 0x4, offset = 0, fixed_abs, tag = 'sflag constant byte address 0x0 - dummy sync flag']
  #allocation16 [shape = 's32[]', space=sflag, size = 0x4, offset = 0, fixed_abs, tag = 'sflag constant byte address 0x0 - dummy sync flag']
  #allocation17 [shape = 's32[]', space=sflag, size = 0x4, offset = 0, fixed_abs, tag = 'sflag constant byte address 0x0 - dummy sync flag']
  #allocation18 [shape = 's32[]', space=sflag, size = 0x4, offset = 0, fixed_abs, tag = 'sflag constant byte address 0x0 - dummy sync flag']
  #allocation19 [shape = 's32[]', space=sflag, size = 0x4, offset = 0, fixed_abs, tag = 'sflag constant byte address 0x0 - dummy sync flag']
  #allocation20 [shape = 's32[]', space=sflag, size = 0x4, offset = 0, fixed_abs, tag = 'sflag constant byte address 0x0 - dummy sync flag']
  #allocation21 [shape = 's32[]', space=sflag, size = 0x4, offset = 0, fixed_abs, tag = 'sflag constant byte address 0x0 - dummy sync flag']
  #allocation22 [shape = 's32[]', space=sflag, size = 0x4, offset = 0, fixed_abs, tag = 'sflag constant byte address 0x0 - dummy sync flag']
  #allocation23 [shape = 's32[]', space=sflag, size = 0x4, offset = 0, fixed_abs, tag = 'sflag constant byte address 0x0 - dummy sync flag']
  #allocation24 [shape = 's32[]', space=sflag, size = 0x4, offset = 0, fixed_abs, tag = 'sflag constant byte address 0x0 - dummy sync flag']
  #allocation25 [shape = 's32[]', space=sflag, size = 0x4, offset = 0, fixed_abs, tag = 'sflag constant byte address 0x0 - dummy sync flag']
  #allocation26 [shape = 's32[]', space=sflag, size = 0x4, offset = 0, fixed_abs, tag = 'sflag constant byte address 0x0 - dummy sync flag']
  #allocation27 [shape = 's32[]', space=sflag, size = 0x4, offset = 0, fixed_abs, tag = 'sflag constant byte address 0x0 - dummy sync flag']
  %s0 = inlined_call_operand.hbm [shape: s32[16], index: 0, kind: input, shape index: {}]
  %s1 = inlined_call_operand.hbm [shape: f32[64,128], index: 1, kind: input, shape index: {}]
  %s2 = inlined_call_operand.hbm [shape: f32[1,8,128], index: 2, kind: input, shape index: {}]
  %s3 = inlined_call_operand.hbm [shape: f32[2,8,128], index: 3, kind: output, shape index: {}]
  %s4 = sld [smem:[#allocation0]]
  $region73: #{_fuse_call.1} parent=0
    _
  %s6 = ssub.s32 1, %s4
  %s7 = scalar_select 0, %s6, %s4
  %9 = dma.hbm_to_smem %s0, 16, [#allocation5], [#allocation4]
  %10 = dma.done [#allocation4], 16
  %11 = sfence
  $region1: #{_fuse_call.1} parent=0
    #allocation6 [shape = 'u8[4096]{0}', space=vmem, size = 0x1000, scoped, tag = 'input window, operand 2, single buffered']
    #allocation7 [shape = 's32[2]{0}', space=sflag, size = 0x8, scoped, tag = 'scoped memory for _fuse_call.1']
    #allocation8 [shape = 's32[2]{0}', space=sflag, size = 0x8, scoped, tag = 'scoped memory for _fuse_call.1']
    #allocation9 [shape = 'u8[8192]{0}', space=vmem, size = 0x2000, scoped, tag = 'output window, operand 0']
    %12 = vsyncpa [#allocation7], 0
    %13 = vsyncpa [#allocation8], 0
    %s14 = scalar_lea.sflag [#allocation8], 1
    %15 = vsyncpa %s14, 0
    loop: start=0, step=1, limit=4
    $region2: #{_fuse_call.1} parent=1 // loop_pre_header
      _
    $region3: #{_fuse_call.1} parent=1 // loop_header
      %s17 = sphi 0, %s21
      %p18 = scmp.ge.s32.totalorder %s17, 4
      %s24 = sphi 0, %s36
      %s25 = sphi 0, %s32
      %s26 = sphi 0, %s24
      %s27 = sphi 0, %s25
      %s28 = sphi 0, %s26
      %s29 = sphi 0, %s27
      %s39 = sphi 0, %s41
      %s42 = sphi 0, %s39
      %s43 = sphi 0, %s42
      %s59 = sphi 0, %s43
      %s67 = sphi 0, %s69
      %s70 = sphi 0, %s67
      %s71 = sphi 0, %s70
      %s87 = sphi 0, %s71
    $region4: #{_fuse_call.1} parent=1 // loop_header_branch
      %20 = sbr.rel (%p18) target = $region8
    $region5: #{_fuse_call.1} parent=1 // loop_body
      %s22 = ssub.s32 %s17, 1
      %s23 = ssub.s32 %s17, 2
      %s30 = sadd.s32 1, %s25
      %p31 = scmp.ge.s32.totalorder %s30, 2
      %s32 = scalar_select %p31, 0, %s30
      %s33 = sadd.s32 1, %s24
      %s34 = scalar_select %p31, %s33, %s24
      %p35 = scmp.ge.s32.totalorder %s34, 1
      %s36 = scalar_select %p35, 0, %s34
      %s37 = ssub.s32 %s24, %s36
      %p38 = scmp.eq.s32.totalorder %s37, 0
      %s40 = sadd.s32 %s39, 1
      %s41 = scalar_select %p38, %s39, %s40
      %p44 = pneg %p38
      %p45 = scmp.eq.s32.totalorder %s17, 1
      %p46 = por %p44, %p45
      %p47 = scmp.ne.s32.totalorder %s39, %s42
      %p48 = scmp.eq.s32.totalorder %s17, 0
      %p49 = por %p47, %p48
      %p50 = scmp.ne.s32.totalorder %s39, %s42
      %p51 = scmp.eq.s32.totalorder %s22, 1
      %p52 = por %p50, %p51
      %p53 = scmp.ne.s32.totalorder %s42, %s43
      %p54 = scmp.eq.s32.totalorder %s22, 0
      %p55 = por %p53, %p54
      %p56 = scmp.ne.s32.totalorder %s42, %s43
      %p57 = scmp.eq.s32.totalorder %s23, 1
      %p58 = por %p56, %p57
      %p60 = scmp.ne.s32.totalorder %s43, %s59
      %p61 = scmp.eq.s32.totalorder %s23, 0
      %p62 = por %p60, %p61
      %s63 = ssub.s32 %s25, %s32
      %s64 = ssub.s32 %s24, %s36
      %s65 = sor.u32 %s63, %s64
      %p66 = scmp.eq.s32.totalorder %s65, 0
      %s68 = sadd.s32 %s67, 1
      %s69 = scalar_select %p66, %s67, %s68
      %p72 = pneg %p66
      %p73 = scmp.eq.s32.totalorder %s17, 1
      %p74 = por %p72, %p73
      %p75 = scmp.ne.s32.totalorder %s67, %s70
      %p76 = scmp.eq.s32.totalorder %s17, 0
      %p77 = por %p75, %p76
      %p78 = scmp.ne.s32.totalorder %s67, %s70
      %p79 = scmp.eq.s32.totalorder %s22, 1
      %p80 = por %p78, %p79
      %p81 = scmp.ne.s32.totalorder %s70, %s71
      %p82 = scmp.eq.s32.totalorder %s22, 0
      %p83 = por %p81, %p82
      %p84 = scmp.ne.s32.totalorder %s70, %s71
      %p85 = scmp.eq.s32.totalorder %s23, 1
      %p86 = por %p84, %p85
      %p88 = scmp.ne.s32.totalorder %s71, %s87
      %p89 = scmp.eq.s32.totalorder %s23, 0
      %p90 = por %p88, %p89
      %p91 = scmp.le.s32.totalorder 1, %s17
      %p92 = scmp.lt.s32.totalorder %s17, 3
      %p93 = pnand %p91, %p92
      %p94 = pneg %p93
      // Predicated region
      $region9: #{_fuse_call.1} parent=5 // pred_check
        _
      $region10: #{_fuse_call.1} parent=5 // pred_check_branch
        %96 = sbr.rel (%p93) target = $region12
      $region11: #{_fuse_call.1} parent=5 // pred_region
        %s97 = ssub.s32 %s17, 1
        // Predicated region
        $region13: #{_fuse_call.1} parent=11 // pred_check
          %p98 = pneg %p55
        $region14: #{_fuse_call.1} parent=11 // pred_check_branch
          %100 = sbr.rel (%p98) target = $region16
        $region15: #{_fuse_call.1} parent=11 // pred_region
          %s102 = ssub.s32 128, 128
          %103 = vsyncadd [#allocation7], %s102
          %s104 = smul.addr %s26, 128
          %s105 = scalar_lea.hbm %s2, %s104
          %s107 = sshll.u32 [#allocation6], 4
          %s108 = int_to_ptr.vmem [resolvable:$true] %s107
          %110 = dma.hbm_to_vmem [thread:$0]  %s105, 128, %s108, [#allocation7]
        $region16: #{_fuse_call.1} parent=11 // pred_fallthru
          _
      $region12: #{_fuse_call.1} parent=5 // pred_fallthru
        _
      %p111 = scmp.lt.s32.totalorder %s17, 2
      // Predicated region
      $region17: #{_fuse_call.1} parent=5 // pred_check
        %p112 = pneg %p111
      $region18: #{_fuse_call.1} parent=5 // pred_check_branch
        %114 = sbr.rel (%p112) target = $region20
      $region19: #{_fuse_call.1} parent=5 // pred_region
        _
      $region20: #{_fuse_call.1} parent=5 // pred_fallthru
        _
      %p115 = scmp.le.s32.totalorder 1, %s17
      %p116 = scmp.lt.s32.totalorder %s17, 3
      %p117 = pnand %p115, %p116
      %p118 = pneg %p117
      // Predicated region
      $region21: #{_fuse_call.1} parent=5 // pred_check
        _
      $region22: #{_fuse_call.1} parent=5 // pred_check_branch
        %120 = sbr.rel (%p117) target = $region24
      $region23: #{_fuse_call.1} parent=5 // pred_region
        %s121 = ssub.s32 %s17, 1
        // Predicated region
        $region25: #{_fuse_call.1} parent=23 // pred_check
          %p122 = pneg %p55
        $region26: #{_fuse_call.1} parent=23 // pred_check_branch
          %124 = sbr.rel (%p122) target = $region28
        $region27: #{_fuse_call.1} parent=23 // pred_region
          %125 = dma.done [#allocation7], 128
        $region28: #{_fuse_call.1} parent=23 // pred_fallthru
          _
        %p126 = pneg %p55
        %p127 = pneg %p52
        %p128 = pneg %p83
        %p129 = pneg %p80
        %s130 = sand.u32 %s70, 1
        %s131 = scalar_lea.sflag [#allocation8], %s130
        %s132 = sand.u32 %s70, 1
        %s133 = smul.addr %s132, 8
        %s134 = scalar_lea.vmem [#allocation9], %s133
        %s135 = smul.u32 %s27, 8
        %s136 = smul.u32 %s26, 8
        %s137 = sadd.s32 %s135, %s136
        %s138 = sld [smem:[#allocation5 + %s137]]
        %s139 = smul.addr %s138, 16
        %s140 = scalar_lea.hbm %s1, %s139
        // Predicated region
        $region29: #{_fuse_call.1} parent=23 // pred_check
          _
        $region30: #{_fuse_call.1} parent=23 // pred_check_branch
          %142 = sbr.rel target = $region32
        $region31: #{_fuse_call.1} parent=23 // pred_region
          %143 = sst [smem:[#allocation12]] [#allocation11]
          %144 = sst [smem:[#allocation13]] [#allocation10]
        $region32: #{_fuse_call.1} parent=23 // pred_fallthru
          _
        %146 = shalt.err (0)
        %s148 = sshll.u32 [#allocation2], 4
        %s149 = int_to_ptr.vmem [resolvable:$true] %s148
        %151 = dma.hbm_to_vmem [thread:$0]  %s140, 16, %s149, [#allocation3]
        %s152 = sadd.s32 %s137, 1
        %s153 = sld [smem:[#allocation5 + %s152]]
        %s154 = smul.addr %s153, 16
        %s155 = scalar_lea.hbm %s1, %s154
        %s156 = scalar_lea.vmem [#allocation2], 1
        %s157 = scalar_lea.sflag [#allocation3], 1
        // Predicated region
        $region33: #{_fuse_call.1} parent=23 // pred_check
          _
        $region34: #{_fuse_call.1} parent=23 // pred_check_branch
          %159 = sbr.rel target = $region36
        $region35: #{_fuse_call.1} parent=23 // pred_region
          %160 = sst [smem:[#allocation12]] [#allocation15]
          %161 = sst [smem:[#allocation13]] [#allocation14]
        $region36: #{_fuse_call.1} parent=23 // pred_fallthru
          _
        %163 = shalt.err (0)
        %s165 = sshll.u32 %s156, 4
        %s166 = int_to_ptr.vmem [resolvable:$true] %s165
        %168 = dma.hbm_to_vmem [thread:$0]  %s155, 16, %s166, %s157
        %s169 = sadd.s32 %s137, 2
        %s170 = sld [smem:[#allocation5 + %s169]]
        %s171 = smul.addr %s170, 16
        %s172 = scalar_lea.hbm %s1, %s171
        %s173 = scalar_lea.vmem [#allocation2], 2
        %s174 = scalar_lea.sflag [#allocation3], 2
        // Predicated region
        $region37: #{_fuse_call.1} parent=23 // pred_check
          _
        $region38: #{_fuse_call.1} parent=23 // pred_check_branch
          %176 = sbr.rel target = $region40
        $region39: #{_fuse_call.1} parent=23 // pred_region
          %177 = sst [smem:[#allocation12]] [#allocation17]
          %178 = sst [smem:[#allocation13]] [#allocation16]
        $region40: #{_fuse_call.1} parent=23 // pred_fallthru
          _
        %180 = shalt.err (0)
        %s182 = sshll.u32 %s173, 4
        %s183 = int_to_ptr.vmem [resolvable:$true] %s182
        %185 = dma.hbm_to_vmem [thread:$0]  %s172, 16, %s183, %s174
        %s186 = sadd.s32 %s137, 3
        %s187 = sld [smem:[#allocation5 + %s186]]
        %s188 = smul.addr %s187, 16
        %s189 = scalar_lea.hbm %s1, %s188
        %s190 = scalar_lea.vmem [#allocation2], 3
        %s191 = scalar_lea.sflag [#allocation3], 3
        // Predicated region
        $region41: #{_fuse_call.1} parent=23 // pred_check
          _
        $region42: #{_fuse_call.1} parent=23 // pred_check_branch
          %193 = sbr.rel target = $region44
        $region43: #{_fuse_call.1} parent=23 // pred_region
          %194 = sst [smem:[#allocation12]] [#allocation19]
          %195 = sst [smem:[#allocation13]] [#allocation18]
        $region44: #{_fuse_call.1} parent=23 // pred_fallthru
          _
        %197 = shalt.err (0)
        %s199 = sshll.u32 %s190, 4
        %s200 = int_to_ptr.vmem [resolvable:$true] %s199
        %202 = dma.hbm_to_vmem [thread:$0]  %s189, 16, %s200, %s191
        %s203 = sadd.s32 %s137, 4
        %s204 = sld [smem:[#allocation5 + %s203]]
        %s205 = smul.addr %s204, 16
        %s206 = scalar_lea.hbm %s1, %s205
        %s207 = scalar_lea.vmem [#allocation2], 4
        %s208 = scalar_lea.sflag [#allocation3], 4
        // Predicated region
        $region45: #{_fuse_call.1} parent=23 // pred_check
          _
        $region46: #{_fuse_call.1} parent=23 // pred_check_branch
          %210 = sbr.rel target = $region48
        $region47: #{_fuse_call.1} parent=23 // pred_region
          %211 = sst [smem:[#allocation12]] [#allocation21]
          %212 = sst [smem:[#allocation13]] [#allocation20]
        $region48: #{_fuse_call.1} parent=23 // pred_fallthru
          _
        %214 = shalt.err (0)
        %s216 = sshll.u32 %s207, 4
        %s217 = int_to_ptr.vmem [resolvable:$true] %s216
        %219 = dma.hbm_to_vmem [thread:$0]  %s206, 16, %s217, %s208
        %s220 = sadd.s32 %s137, 5
        %s221 = sld [smem:[#allocation5 + %s220]]
        %s222 = smul.addr %s221, 16
        %s223 = scalar_lea.hbm %s1, %s222
        %s224 = scalar_lea.vmem [#allocation2], 5
        %s225 = scalar_lea.sflag [#allocation3], 5
        // Predicated region
        $region49: #{_fuse_call.1} parent=23 // pred_check
          _
        $region50: #{_fuse_call.1} parent=23 // pred_check_branch
          %227 = sbr.rel target = $region52
        $region51: #{_fuse_call.1} parent=23 // pred_region
          %228 = sst [smem:[#allocation12]] [#allocation23]
          %229 = sst [smem:[#allocation13]] [#allocation22]
        $region52: #{_fuse_call.1} parent=23 // pred_fallthru
          _
        %231 = shalt.err (0)
        %s233 = sshll.u32 %s224, 4
        %s234 = int_to_ptr.vmem [resolvable:$true] %s233
        %236 = dma.hbm_to_vmem [thread:$0]  %s223, 16, %s234, %s225
        %s237 = sadd.s32 %s137, 6
        %s238 = sld [smem:[#allocation5 + %s237]]
        %s239 = smul.addr %s238, 16
        %s240 = scalar_lea.hbm %s1, %s239
        %s241 = scalar_lea.vmem [#allocation2], 6
        %s242 = scalar_lea.sflag [#allocation3], 6
        // Predicated region
        $region53: #{_fuse_call.1} parent=23 // pred_check
          _
        $region54: #{_fuse_call.1} parent=23 // pred_check_branch
          %244 = sbr.rel target = $region56
        $region55: #{_fuse_call.1} parent=23 // pred_region
          %245 = sst [smem:[#allocation12]] [#allocation25]
          %246 = sst [smem:[#allocation13]] [#allocation24]
        $region56: #{_fuse_call.1} parent=23 // pred_fallthru
          _
        %248 = shalt.err (0)
        %s250 = sshll.u32 %s241, 4
        %s251 = int_to_ptr.vmem [resolvable:$true] %s250
        %253 = dma.hbm_to_vmem [thread:$0]  %s240, 16, %s251, %s242
        %s254 = sadd.s32 %s137, 7
        %s255 = sld [smem:[#allocation5 + %s254]]
        %s256 = smul.addr %s255, 16
        %s257 = scalar_lea.hbm %s1, %s256
        %s258 = scalar_lea.vmem [#allocation2], 7
        %s259 = scalar_lea.sflag [#allocation3], 7
        // Predicated region
        $region57: #{_fuse_call.1} parent=23 // pred_check
          _
        $region58: #{_fuse_call.1} parent=23 // pred_check_branch
          %261 = sbr.rel target = $region60
        $region59: #{_fuse_call.1} parent=23 // pred_region
          %262 = sst [smem:[#allocation12]] [#allocation27]
          %263 = sst [smem:[#allocation13]] [#allocation26]
        $region60: #{_fuse_call.1} parent=23 // pred_fallthru
          _
        %265 = shalt.err (0)
        %s267 = sshll.u32 %s258, 4
        %s268 = int_to_ptr.vmem [resolvable:$true] %s267
        %270 = dma.hbm_to_vmem [thread:$0]  %s257, 16, %s268, %s259
        %s271 = smul.u32 1, 1
        %s272 = sshll.u32 %s271, 4
        %273 = dma.done [#allocation3], %s272
        %s274 = sshll.u32 %s271, 4
        %275 = dma.done %s157, %s274
        %s276 = sshll.u32 %s271, 4
        %277 = dma.done %s174, %s276
        %s278 = sshll.u32 %s271, 4
        %279 = dma.done %s191, %s278
        %s280 = sshll.u32 %s271, 4
        %281 = dma.done %s208, %s280
        %s282 = sshll.u32 %s271, 4
        %283 = dma.done %s225, %s282
        %s284 = sshll.u32 %s271, 4
        %285 = dma.done %s242, %s284
        %s286 = sshll.u32 %s271, 4
        %287 = dma.done %s259, %s286
        %v288 = vld [vmem:[#allocation2] sm:$0xff]
        %v289 = vld [vmem:[#allocation6] sm:$0xff]
        %v290 = vadd.f32 %v288, %v289
        %291 = vst [vmem:[%s134] sm:$0xff] %v290
        %s292 = sand.u32 %s70, 1
        %s293 = scalar_lea.sflag [#allocation8], %s292
        %s294 = sand.u32 %s70, 1
        %s295 = smul.addr %s294, 8
        %s296 = scalar_lea.vmem [#allocation9], %s295
        // Predicated region
        $region61: #{_fuse_call.1} parent=23 // pred_check
          %p297 = pneg %p80
        $region62: #{_fuse_call.1} parent=23 // pred_check_branch
          %299 = sbr.rel (%p297) target = $region64
        $region63: #{_fuse_call.1} parent=23 // pred_region
          %s301 = ssub.s32 128, 128
          %302 = vsyncadd %s293, %s301
          %s303 = sadd.s32 %s26, %s27
          %s304 = smul.addr %s303, 128
          %s305 = scalar_lea.hbm %s3, %s304
          %s307 = sshll.u32 %s296, 4
          %s308 = int_to_ptr.vmem [resolvable:$true] %s307
          %310 = dma.vmem_to_hbm [thread:$0]  %s308, 128, %s305, %s293
        $region64: #{_fuse_call.1} parent=23 // pred_fallthru
          _
      $region24: #{_fuse_call.1} parent=5 // pred_fallthru
        _
      %p311 = scmp.le.s32.totalorder 2, %s17
      // Predicated region
      $region65: #{_fuse_call.1} parent=5 // pred_check
        %p312 = pneg %p311
      $region66: #{_fuse_call.1} parent=5 // pred_check_branch
        %314 = sbr.rel (%p312) target = $region68
      $region67: #{_fuse_call.1} parent=5 // pred_region
        %s315 = ssub.s32 %s17, 2
        // Predicated region
        $region69: #{_fuse_call.1} parent=67 // pred_check
          %p316 = pneg %p86
        $region70: #{_fuse_call.1} parent=67 // pred_check_branch
          %318 = sbr.rel (%p316) target = $region72
        $region71: #{_fuse_call.1} parent=67 // pred_region
          %s319 = sand.u32 %s71, 1
          %s320 = scalar_lea.sflag [#allocation8], %s319
          %s321 = sand.u32 %s71, 1
          %s322 = smul.addr %s321, 8
          %s323 = scalar_lea.vmem [#allocation9], %s322
          %324 = dma.done %s320, 128
        $region72: #{_fuse_call.1} parent=67 // pred_fallthru
          _
      $region68: #{_fuse_call.1} parent=5 // pred_fallthru
        _
    $region6: #{_fuse_call.1} parent=1 // loop_footer
      %s21 = sadd.s32 1, %s17
    $region7: #{_fuse_call.1} parent=1 // loop_footer_branch
      %16 = sbr.rel target = $region3
    $region8: #{_fuse_call.1} parent=1 // loop_exit
      _
    %325 = vsyncpa [#allocation7], 1
    %s326 = scalar_lea.sflag [#allocation7], 1
    %327 = vsyncpa %s326, 1
    %328 = vsyncpa [#allocation8], 1
    %s329 = scalar_lea.sflag [#allocation8], 1
    %330 = vsyncpa %s329, 1
  %331 = vsyncmov [#allocation3]
  %s332 = vpop.sfrf %331
  %p333 = scmp.eq.s32.totalorder %s332, 0
  %p334 = pneg %p333
  %336 = shalt.err (%p334)
  %s337 = scalar_lea.sflag [#allocation3], 1
  %338 = vsyncmov %s337
  %s339 = vpop.sfrf %338
  %p340 = scmp.eq.s32.totalorder %s339, 0
  %p341 = pneg %p340
  %343 = shalt.err (%p341)
  %s344 = scalar_lea.sflag [#allocation3], 2
  %345 = vsyncmov %s344
  %s346 = vpop.sfrf %345
  %p347 = scmp.eq.s32.totalorder %s346, 0
  %p348 = pneg %p347
  %350 = shalt.err (%p348)
  %s351 = scalar_lea.sflag [#allocation3], 3
  %352 = vsyncmov %s351
  %s353 = vpop.sfrf %352
  %p354 = scmp.eq.s32.totalorder %s353, 0
  %p355 = pneg %p354
  %357 = shalt.err (%p355)
  %s358 = scalar_lea.sflag [#allocation3], 4
  %359 = vsyncmov %s358
  %s360 = vpop.sfrf %359
  %p361 = scmp.eq.s32.totalorder %s360, 0
  %p362 = pneg %p361
  %364 = shalt.err (%p362)
  %s365 = scalar_lea.sflag [#allocation3], 5
  %366 = vsyncmov %s365
  %s367 = vpop.sfrf %366
  %p368 = scmp.eq.s32.totalorder %s367, 0
  %p369 = pneg %p368
  %371 = shalt.err (%p369)
  %s372 = scalar_lea.sflag [#allocation3], 6
  %373 = vsyncmov %s372
  %s374 = vpop.sfrf %373
  %p375 = scmp.eq.s32.totalorder %s374, 0
  %p376 = pneg %p375
  %378 = shalt.err (%p376)
  %s379 = scalar_lea.sflag [#allocation3], 7
  %380 = vsyncmov %s379
  %s381 = vpop.sfrf %380
  %p382 = scmp.eq.s32.totalorder %s381, 0
  %p383 = pneg %p382
  %385 = shalt.err (%p383)

</llo_original>
